<compile_context>
chip_gen: v7x
topology: tpu7x:2x2x1
jax: 0.10.0
libtpu: 0.0.40
codegen_flags: <defaults>
</compile_context>

<pallas_src>
import functools

import jax
import jax.numpy as jnp
from jax.experimental import pallas as pl
from jax.experimental.pallas import tpu as pltpu

_LANE = 128
_SUBLANE = 8
# Budget for the double-buffered, tk-dependent streamed blocks (x and W tiles).
_TK_STREAM_BUDGET_BYTES = 12 * 1024 * 1024
# Explicit scoped-VMEM cap: safe on v5e/v6e (128 MiB phys) and v7x (64 MiB phys).
_VMEM_LIMIT_BYTES = 32 * 1024 * 1024


def _round_up(x, m):
    return (x + m - 1) // m * m


def _cdiv(a, b):
    return -(-a // b)


def _pick_n_tile(n_pad):
    for cand in (512, 384, 256, 128):
        if n_pad >= cand and n_pad % cand == 0:
            return cand
    return n_pad


def _mlp_kernel(t_ref, x_ref, w_ref, b_ref, o_ref):
    # grid: (j over N tiles [parallel], k over K tiles [reduction, arbitrary]).
    k = pl.program_id(1)

    # o_ref is VMEM-resident across the K reduction (out index_map ignores k),
    # so it is the f32 accumulator: seed it with the bias at k == 0.
    @pl.when(k == 0)
    def _():
        o_ref[...] = jnp.broadcast_to(b_ref[0].astype(jnp.float32), o_ref.shape)

    # x_ref: (B_pad, tk); w_ref: (1, tk, tn) -> accumulate (B_pad, tn) in f32.
    o_ref[...] += jnp.dot(
        x_ref[...], w_ref[0], preferred_element_type=jnp.float32
    )


def prepare_params(w_all, b_all):
    """One-time lane-dense relayout of the stacked Linear parameters.

    w_all: (T, K, N)  -- stacked, transposed nn.Linear weights (in, out).
    b_all: (T, N)
    Returns w_pad (T, K, N_pad) and b_pad (T, 1, N_pad) with N_pad = roundup(N, 128).
    """
    T, K, N = w_all.shape
    n_pad = _round_up(N, _LANE)
    w_pad = jnp.pad(w_all, ((0, 0), (0, 0), (0, n_pad - N)))
    b_pad = jnp.pad(b_all, ((0, 0), (0, n_pad - N))).reshape(T, 1, n_pad)
    return w_pad, b_pad


@functools.partial(jax.jit, static_argnames=("out_features",))
def custom_mlp_forward(x, w_pad, b_pad, timestep_index, *, out_features):
    """x: (B, C, H, W); w_pad: (T, K, N_pad); b_pad: (T, 1, N_pad); scalar timestep."""
    batch = x.shape[0]
    x_flat = x.reshape(batch, -1)               # (B, K) — same as torch reshape
    T, K, n_pad = w_pad.shape
    assert x_flat.shape[1] == K, (x_flat.shape, w_pad.shape)
    assert n_pad % _LANE == 0

    tn = _pick_n_tile(n_pad)
    b_rows = _round_up(batch, _SUBLANE)         # MXU M / sublane dim

    # Pick the largest K tile that keeps the double-buffered streamed blocks
    # inside the VMEM budget; for small K the whole reduction is one tile.
    itemsize = max(x_flat.dtype.itemsize, w_pad.dtype.itemsize)
    per_tk_bytes = 2 * (b_rows + tn) * itemsize          # double-buffered x + W
    tk_cap = max(_LANE, (_TK_STREAM_BUDGET_BYTES // per_tk_bytes) // _LANE * _LANE)
    k_aligned = _round_up(K, _LANE)
    if k_aligned <= tk_cap:
        tk, k_pad = k_aligned, k_aligned
    else:
        nk = _cdiv(k_aligned, tk_cap)
        tk = _round_up(_cdiv(k_aligned, nk), _LANE)
        k_pad = tk * nk

    if (b_rows, k_pad) != (batch, K):
        x_flat = jnp.pad(x_flat, ((0, b_rows - batch), (0, k_pad - K)))
    if k_pad != K:
        w_pad = jnp.pad(w_pad, ((0, 0), (0, k_pad - K), (0, 0)))

    t_idx = jnp.asarray(timestep_index, dtype=jnp.int32).reshape((1,))

    grid_spec = pltpu.PrefetchScalarGridSpec(
        num_scalar_prefetch=1,
        grid=(n_pad // tn, k_pad // tk),
        in_specs=[
            # x: tiled along K only.
            pl.BlockSpec((b_rows, tk), lambda j, k, t: (0, k)),
            # stacked weights: timestep slice via scalar-prefetched index.
            pl.BlockSpec((1, tk, tn), lambda j, k, t: (t[0], k, j)),
            # stacked biases: timestep slice.
            pl.BlockSpec((1, 1, tn), lambda j, k, t: (t[0], 0, j)),
        ],
        out_specs=pl.BlockSpec((b_rows, tn), lambda j, k, t: (0, j)),
    )

    out = pl.pallas_call(
        _mlp_kernel,
        out_shape=jax.ShapeDtypeStruct((b_rows, n_pad), jnp.float32),
        grid_spec=grid_spec,
        compiler_params=pltpu.CompilerParams(
            # N tiles are independent (megacore-shardable on v7x); K is the
            # reduction axis, innermost and arbitrary.
            dimension_semantics=("parallel", "arbitrary"),
            vmem_limit_bytes=_VMEM_LIMIT_BYTES,
        ),
    )(t_idx, x_flat, w_pad, b_pad)

    return out[:batch, :out_features].astype(x.dtype)


def init_params(key, num_timesteps, input_size, output_size, dtype=jnp.float32):
    """Synthetic nn.Linear-style init; weights stored transposed (in, out), stacked over T."""
    kw, kb = jax.random.split(key)
    bound = 1.0 / (input_size ** 0.5)
    w_all = jax.random.uniform(
        kw, (num_timesteps, input_size, output_size), dtype, -bound, bound
    )
    b_all = jax.random.uniform(
        kb, (num_timesteps, output_size), dtype, -bound, bound
    )
    return w_all, b_all


if __name__ == "__main__":
    # Small shapes consistent with the module (real module: C=1280, 8x8 spatial,
    # num_classes=2, 50 timesteps); here K = 16*8*8 = 1024.
    B, C, H, W = 2, 16, 8, 8
    NUM_CLASSES = 2
    T = 8
    TIMESTEP = 5

    key = jax.random.PRNGKey(0)
    kx, kp = jax.random.split(key)
    x = jax.random.normal(kx, (B, C, H, W), jnp.float32)
    w_all, b_all = init_params(kp, T, C * H * W, NUM_CLASSES)
    w_pad, b_pad = prepare_params(w_all, b_all)     # one-time lane-dense relayout

    out = custom_mlp_forward(x, w_pad, b_pad, TIMESTEP, out_features=NUM_CLASSES)
    out = jax.block_until_ready(out)

    # Pure-JAX reference (unpadded params).
    ref = x.reshape(B, -1) @ w_all[TIMESTEP] + b_all[TIMESTEP]
    assert out.shape == (B, NUM_CLASSES), out.shape
    assert jnp.allclose(out, ref, atol=1e-3, rtol=1e-3), (out, ref)

    print("KERNEL_OK")
</pallas_src>

<mosaic_0001>
module attributes {stable_mosaic.version = 11 : i64} {
  func.func @_mlp_kernel(%arg0: i32, %arg1: i32, %arg2: memref<1xi32, #tpu.memory_space<smem>>, %arg3: memref<8x1024xf32, #tpu.memory_space<vmem>>, %arg4: memref<1x1024x128xf32, #tpu.memory_space<vmem>>, %arg5: memref<1x1x128xf32, #tpu.memory_space<vmem>>, %arg6: memref<8x128xf32, #tpu.memory_space<vmem>>) attributes {dimension_semantics = [#tpu.dimension_semantics<parallel>, #tpu.dimension_semantics<arbitrary>], iteration_bounds = array<i64: 1, 1>, scalar_prefetch = 1 : i64, scratch_operands = 0 : i64, tpu.core_type = #tpu.core_type<tc>, window_params = [{transform_indices = @transform_0, window_bounds = array<i64: 8, 1024>}, {transform_indices = @transform_1, window_bounds = array<i64: 1, 1024, 128>}, {transform_indices = @transform_2, window_bounds = array<i64: 1, 1, 128>}, {transform_indices = @transform_3, window_bounds = array<i64: 8, 128>}]} {
    %c0_i32 = arith.constant 0 : i32
    %0 = arith.cmpi eq, %arg1, %c0_i32 : i32
    %1 = arith.extui %0 : i1 to i32
    %c0_i32_0 = arith.constant 0 : i32
    %2 = arith.cmpi ne, %1, %c0_i32_0 : i32
    scf.if %2 {
      %c0_9 = arith.constant 0 : index
      %c0_10 = arith.constant 0 : index
      %c0_11 = arith.constant 0 : index
      %10 = vector.load %arg5[%c0_9, %c0_10, %c0_11] : memref<1x1x128xf32, #tpu.memory_space<vmem>>, vector<1x1x128xf32>
      %11 = vector.shape_cast %10 : vector<1x1x128xf32> to vector<1x128xf32>
      %12 = vector.shape_cast %11 : vector<1x128xf32> to vector<1x128xf32>
      %13 = vector.broadcast %12 : vector<1x128xf32> to vector<8x128xf32>
      %c0_12 = arith.constant 0 : index
      %c0_13 = arith.constant 0 : index
      %14 = vector.load %arg6[%c0_12, %c0_13] : memref<8x128xf32, #tpu.memory_space<vmem>>, vector<8x128xf32>
      tpu.vector_store %arg6[%c0_12, %c0_13], %13 {strides = array<i32>} : memref<8x128xf32, #tpu.memory_space<vmem>>, vector<8x128xf32>,
    } else {
    }
    %c0 = arith.constant 0 : index
    %c0_1 = arith.constant 0 : index
    %3 = vector.load %arg6[%c0, %c0_1] : memref<8x128xf32, #tpu.memory_space<vmem>>, vector<8x128xf32>
    %c0_2 = arith.constant 0 : index
    %c0_3 = arith.constant 0 : index
    %4 = vector.load %arg3[%c0_2, %c0_3] : memref<8x1024xf32, #tpu.memory_space<vmem>>, vector<8x1024xf32>
    %c0_4 = arith.constant 0 : index
    %c0_5 = arith.constant 0 : index
    %c0_6 = arith.constant 0 : index
    %5 = vector.load %arg4[%c0_4, %c0_5, %c0_6] : memref<1x1024x128xf32, #tpu.memory_space<vmem>>, vector<1x1024x128xf32>
    %6 = vector.shape_cast %5 : vector<1x1024x128xf32> to vector<1024x128xf32>
    %cst = arith.constant dense<0.000000e+00> : vector<8x128xf32>
    %7 = tpu.matmul %4, %6, %cst {dimension_numbers = #tpu.dot_dimension_numbers<[1], [0], [0], [1], [0, 0, 1, 1], [], []>} : vector<8x1024xf32>, vector<1024x128xf32>, vector<8x128xf32> -> vector<8x128xf32>
    %8 = arith.addf %3, %7 : vector<8x128xf32>
    %c0_7 = arith.constant 0 : index
    %c0_8 = arith.constant 0 : index
    %9 = vector.load %arg6[%c0_7, %c0_8] : memref<8x128xf32, #tpu.memory_space<vmem>>, vector<8x128xf32>
    tpu.vector_store %arg6[%c0_7, %c0_8], %8 {strides = array<i32>} : memref<8x128xf32, #tpu.memory_space<vmem>>, vector<8x128xf32>,
    return
  }
  func.func @transform_0(%arg0: i32, %arg1: i32, %arg2: memref<1xi32, #tpu.memory_space<smem>>) -> (i32, i32) {
    %c0_i32 = arith.constant 0 : i32
    %c0_i32_0 = arith.constant 0 : i32
    return %c0_i32, %arg1 : i32, i32
  }
  func.func @transform_1(%arg0: i32, %arg1: i32, %arg2: memref<1xi32, #tpu.memory_space<smem>>) -> (i32, i32, i32) {
    %c0 = arith.constant 0 : index
    %0 = memref.load %arg2[%c0] : memref<1xi32, #tpu.memory_space<smem>>
    %c0_i32 = arith.constant 0 : i32
    return %0, %arg1, %arg0 : i32, i32, i32
  }
  func.func @transform_2(%arg0: i32, %arg1: i32, %arg2: memref<1xi32, #tpu.memory_space<smem>>) -> (i32, i32, i32) {
    %c0 = arith.constant 0 : index
    %0 = memref.load %arg2[%c0] : memref<1xi32, #tpu.memory_space<smem>>
    %c0_i32 = arith.constant 0 : i32
    %c0_i32_0 = arith.constant 0 : i32
    return %0, %c0_i32, %arg0 : i32, i32, i32
  }
  func.func @transform_3(%arg0: i32, %arg1: i32, %arg2: memref<1xi32, #tpu.memory_space<smem>>) -> (i32, i32) {
    %c0_i32 = arith.constant 0 : i32
    %c0_i32_0 = arith.constant 0 : i32
    return %c0_i32, %arg0 : i32, i32
  }
}

</mosaic_0001>

<llo_original>
// kernel: custom_mlp_forward.1
$region0: #{custom_mlp_forward.1}
  #allocation0 [shape = 'u32[]', space=smem, size = 0x4, offset = 0x4, fixed_abs, tag = 'smem constant byte address 0x4 - core index']
  #allocation1 [shape = 'u32[144,128]{1,0:T(1,128)}', space=vmem, size = 0x12000, scoped, tag = 'internal scratch']
  #allocation2 [shape = 's32[1]{0}', space=sflag, size = 0x4, scoped, tag = 'scoped memory for custom_mlp_forward.1']
  #allocation3 [shape = 's32[1]{0:T(128)S(6)}', space=smem, size = 0x200, scoped, tag = 'prefetched SMEM operand 0']
  %s0 = inlined_call_operand.<no memory space> [shape: s32[1], index: 0, kind: input, shape index: {}]
  %s1 = inlined_call_operand.vmem [shape: f32[8,1024], index: 1, kind: input, shape index: {}]
  %s2 = inlined_call_operand.hbm [shape: f32[8,1024,128], index: 2, kind: input, shape index: {}]
  %s3 = inlined_call_operand.hbm [shape: f32[8,1,128], index: 3, kind: input, shape index: {}]
  %s4 = inlined_call_operand.vmem [shape: f32[8,128], index: 4, kind: output, shape index: {}]
  %s5 = sld [smem:[#allocation0]]
  $region34: #{custom_mlp_forward.1} parent=0
    _
  %s7 = ssub.s32 1, %s5
  %s8 = scalar_select 0, %s7, %s5
  %9 = sst [smem:[#allocation3]] %s0
  $region1: #{custom_mlp_forward.1} parent=0
    #allocation4 [shape = 'u8[524288]{0}', space=vmem, size = 0x80000, scoped, tag = 'input window, operand 2, single buffered']
    #allocation5 [shape = 's32[1]{0}', space=sflag, size = 0x4, scoped, tag = 'scoped memory for custom_mlp_forward.1']
    #allocation6 [shape = 'u8[512]{0}', space=vmem, size = 0x400, scoped, tag = 'input window, operand 3, single buffered']
    #allocation7 [shape = 's32[1]{0}', space=sflag, size = 0x4, scoped, tag = 'scoped memory for custom_mlp_forward.1']
    %10 = vsyncpa [#allocation5], 0
    %11 = vsyncpa [#allocation7], 0
    // Predicated region
    $region2: #{custom_mlp_forward.1} parent=1 // pred_check
      _
    $region3: #{custom_mlp_forward.1} parent=1 // pred_check_branch
      %13 = sbr.rel (0) target = $region5
    $region4: #{custom_mlp_forward.1} parent=1 // pred_region
      _
    $region5: #{custom_mlp_forward.1} parent=1 // pred_fallthru
      _
    // Predicated region
    $region6: #{custom_mlp_forward.1} parent=1 // pred_check
      _
    $region7: #{custom_mlp_forward.1} parent=1 // pred_check_branch
      %15 = sbr.rel (0) target = $region9
    $region8: #{custom_mlp_forward.1} parent=1 // pred_region
      %s16 = sld [smem:[#allocation3]]
      %s18 = ssub.s32 16384, 16384
      %19 = vsyncadd [#allocation5], %s18
      %s20 = smul.addr %s16, 128
      %s21 = smul.addr %s20, 128
      %s22 = scalar_lea.hbm %s2, %s21
      %s23 = sshll.u32 [#allocation4], 4
      %s24 = int_to_ptr.vmem [resolvable:$true] %s23
      %29 = dma.hbm_to_vmem [thread:$0]  %s22, 16384, %s24, [#allocation5], 128, 128, 8
    $region9: #{custom_mlp_forward.1} parent=1 // pred_fallthru
      _
    // Predicated region
    $region10: #{custom_mlp_forward.1} parent=1 // pred_check
      _
    $region11: #{custom_mlp_forward.1} parent=1 // pred_check_branch
      %31 = sbr.rel (0) target = $region13
    $region12: #{custom_mlp_forward.1} parent=1 // pred_region
      %s32 = sld [smem:[#allocation3]]
      %s34 = ssub.s32 16, 16
      %35 = vsyncadd [#allocation7], %s34
      %s36 = smul.addr %s32, 16
      %s37 = scalar_lea.hbm %s3, %s36
      %s39 = sshll.u32 [#allocation6], 4
      %s40 = int_to_ptr.vmem [resolvable:$true] %s39
      %42 = dma.hbm_to_vmem [thread:$0]  %s37, 16, %s40, [#allocation7]
    $region13: #{custom_mlp_forward.1} parent=1 // pred_fallthru
      _
    // Predicated region
    $region14: #{custom_mlp_forward.1} parent=1 // pred_check
      _
    $region15: #{custom_mlp_forward.1} parent=1 // pred_check_branch
      %44 = sbr.rel (0) target = $region17
    $region16: #{custom_mlp_forward.1} parent=1 // pred_region
      %45 = dma.done [#allocation5], 16384
    $region17: #{custom_mlp_forward.1} parent=1 // pred_fallthru
      _
    // Predicated region
    $region18: #{custom_mlp_forward.1} parent=1 // pred_check
      _
    $region19: #{custom_mlp_forward.1} parent=1 // pred_check_branch
      %47 = sbr.rel (0) target = $region21
    $region20: #{custom_mlp_forward.1} parent=1 // pred_region
      %48 = dma.done [#allocation7], 16
    $region21: #{custom_mlp_forward.1} parent=1 // pred_fallthru
      _
    %s49 = sld [smem:[#allocation3]]
    %s50 = sld [smem:[#allocation3]]
    %p51 = scmp.eq.s32.totalorder 0, 0
    // Predicated region
    $region22: #{custom_mlp_forward.1} parent=1 // pred_check
      %p52 = pneg %p51
    $region23: #{custom_mlp_forward.1} parent=1 // pred_check_branch
      %54 = sbr.rel (%p52) target = $region25
    $region24: #{custom_mlp_forward.1} parent=1 // pred_region
      %v55 = vld [vmem:[#allocation6] sm:$0x1]
      %v57 = vlaneseq
      %v58 = vshrl.u32 %v57, 7
      %v59 = vsub.s32 0, %v58
      %v60 = vrot.slane %v55, %v59
      %62 = vst [vmem:[%s4] sm:$0xff] %v60
    $region25: #{custom_mlp_forward.1} parent=1 // pred_fallthru
      _
    %v63 = vld [vmem:[%s4] sm:$0xff]
    %v64 = vld [vmem:[%s1] sm:$0xff]
    %v65 = vld [vmem:[%s1 + $0x8] sm:$0xff]
    %v66 = vld [vmem:[%s1 + $0x10] sm:$0xff]
    %v67 = vld [vmem:[%s1 + $0x18] sm:$0xff]
    %v68 = vld [vmem:[%s1 + $0x20] sm:$0xff]
    %v69 = vld [vmem:[%s1 + $0x28] sm:$0xff]
    %v70 = vld [vmem:[%s1 + $0x30] sm:$0xff]
    %v71 = vld [vmem:[%s1 + $0x38] sm:$0xff]
    %v72 = vld [vmem:[#allocation4] sm:$0xff]
    %v73 = vld [vmem:[#allocation4 + $0x8] sm:$0xff]
    %v74 = vld [vmem:[#allocation4 + $0x10] sm:$0xff]
    %v75 = vld [vmem:[#allocation4 + $0x18] sm:$0xff]
    %v76 = vld [vmem:[#allocation4 + $0x20] sm:$0xff]
    %v77 = vld [vmem:[#allocation4 + $0x28] sm:$0xff]
    %v78 = vld [vmem:[#allocation4 + $0x30] sm:$0xff]
    %v79 = vld [vmem:[#allocation4 + $0x38] sm:$0xff]
    %v80 = vld [vmem:[#allocation4 + $0x40] sm:$0xff]
    %v81 = vld [vmem:[#allocation4 + $0x48] sm:$0xff]
    %v82 = vld [vmem:[#allocation4 + $0x50] sm:$0xff]
    %v83 = vld [vmem:[#allocation4 + $0x58] sm:$0xff]
    %v84 = vld [vmem:[#allocation4 + $0x60] sm:$0xff]
    %v85 = vld [vmem:[#allocation4 + $0x68] sm:$0xff]
    %v86 = vld [vmem:[#allocation4 + $0x70] sm:$0xff]
    %v87 = vld [vmem:[#allocation4 + $0x78] sm:$0xff]
    %v88 = vld [vmem:[#allocation4 + $0x80] sm:$0xff]
    %v89 = vld [vmem:[#allocation4 + $0x88] sm:$0xff]
    %v90 = vld [vmem:[#allocation4 + $0x90] sm:$0xff]
    %v91 = vld [vmem:[#allocation4 + $0x98] sm:$0xff]
    %v92 = vld [vmem:[#allocation4 + $0xa0] sm:$0xff]
    %v93 = vld [vmem:[#allocation4 + $0xa8] sm:$0xff]
    %v94 = vld [vmem:[#allocation4 + $0xb0] sm:$0xff]
    %v95 = vld [vmem:[#allocation4 + $0xb8] sm:$0xff]
    %v96 = vld [vmem:[#allocation4 + $0xc0] sm:$0xff]
    %v97 = vld [vmem:[#allocation4 + $0xc8] sm:$0xff]
    %v98 = vld [vmem:[#allocation4 + $0xd0] sm:$0xff]
    %v99 = vld [vmem:[#allocation4 + $0xd8] sm:$0xff]
    %v100 = vld [vmem:[#allocation4 + $0xe0] sm:$0xff]
    %v101 = vld [vmem:[#allocation4 + $0xe8] sm:$0xff]
    %v102 = vld [vmem:[#allocation4 + $0xf0] sm:$0xff]
    %v103 = vld [vmem:[#allocation4 + $0xf8] sm:$0xff]
    %v104 = vld [vmem:[#allocation4 + $0x100] sm:$0xff]
    %v105 = vld [vmem:[#allocation4 + $0x108] sm:$0xff]
    %v106 = vld [vmem:[#allocation4 + $0x110] sm:$0xff]
    %v107 = vld [vmem:[#allocation4 + $0x118] sm:$0xff]
    %v108 = vld [vmem:[#allocation4 + $0x120] sm:$0xff]
    %v109 = vld [vmem:[#allocation4 + $0x128] sm:$0xff]
    %v110 = vld [vmem:[#allocation4 + $0x130] sm:$0xff]
    %v111 = vld [vmem:[#allocation4 + $0x138] sm:$0xff]
    %v112 = vld [vmem:[#allocation4 + $0x140] sm:$0xff]
    %v113 = vld [vmem:[#allocation4 + $0x148] sm:$0xff]
    %v114 = vld [vmem:[#allocation4 + $0x150] sm:$0xff]
    %v115 = vld [vmem:[#allocation4 + $0x158] sm:$0xff]
    %v116 = vld [vmem:[#allocation4 + $0x160] sm:$0xff]
    %v117 = vld [vmem:[#allocation4 + $0x168] sm:$0xff]
    %v118 = vld [vmem:[#allocation4 + $0x170] sm:$0xff]
    %v119 = vld [vmem:[#allocation4 + $0x178] sm:$0xff]
    %v120 = vld [vmem:[#allocation4 + $0x180] sm:$0xff]
    %v121 = vld [vmem:[#allocation4 + $0x188] sm:$0xff]
    %v122 = vld [vmem:[#allocation4 + $0x190] sm:$0xff]
    %v123 = vld [vmem:[#allocation4 + $0x198] sm:$0xff]
    %v124 = vld [vmem:[#allocation4 + $0x1a0] sm:$0xff]
    %v125 = vld [vmem:[#allocation4 + $0x1a8] sm:$0xff]
    %v126 = vld [vmem:[#allocation4 + $0x1b0] sm:$0xff]
    %v127 = vld [vmem:[#allocation4 + $0x1b8] sm:$0xff]
    %v128 = vld [vmem:[#allocation4 + $0x1c0] sm:$0xff]
    %v129 = vld [vmem:[#allocation4 + $0x1c8] sm:$0xff]
    %v130 = vld [vmem:[#allocation4 + $0x1d0] sm:$0xff]
    %v131 = vld [vmem:[#allocation4 + $0x1d8] sm:$0xff]
    %v132 = vld [vmem:[#allocation4 + $0x1e0] sm:$0xff]
    %v133 = vld [vmem:[#allocation4 + $0x1e8] sm:$0xff]
    %v134 = vld [vmem:[#allocation4 + $0x1f0] sm:$0xff]
    %v135 = vld [vmem:[#allocation4 + $0x1f8] sm:$0xff]
    %v136 = vld [vmem:[#allocation4 + $0x200] sm:$0xff]
    %v137 = vld [vmem:[#allocation4 + $0x208] sm:$0xff]
    %v138 = vld [vmem:[#allocation4 + $0x210] sm:$0xff]
    %v139 = vld [vmem:[#allocation4 + $0x218] sm:$0xff]
    %v140 = vld [vmem:[#allocation4 + $0x220] sm:$0xff]
    %v141 = vld [vmem:[#allocation4 + $0x228] sm:$0xff]
    %v142 = vld [vmem:[#allocation4 + $0x230] sm:$0xff]
    %v143 = vld [vmem:[#allocation4 + $0x238] sm:$0xff]
    %v144 = vld [vmem:[#allocation4 + $0x240] sm:$0xff]
    %v145 = vld [vmem:[#allocation4 + $0x248] sm:$0xff]
    %v146 = vld [vmem:[#allocation4 + $0x250] sm:$0xff]
    %v147 = vld [vmem:[#allocation4 + $0x258] sm:$0xff]
    %v148 = vld [vmem:[#allocation4 + $0x260] sm:$0xff]
    %v149 = vld [vmem:[#allocation4 + $0x268] sm:$0xff]
    %v150 = vld [vmem:[#allocation4 + $0x270] sm:$0xff]
    %v151 = vld [vmem:[#allocation4 + $0x278] sm:$0xff]
    %v152 = vld [vmem:[#allocation4 + $0x280] sm:$0xff]
    %v153 = vld [vmem:[#allocation4 + $0x288] sm:$0xff]
    %v154 = vld [vmem:[#allocation4 + $0x290] sm:$0xff]
    %v155 = vld [vmem:[#allocation4 + $0x298] sm:$0xff]
    %v156 = vld [vmem:[#allocation4 + $0x2a0] sm:$0xff]
    %v157 = vld [vmem:[#allocation4 + $0x2a8] sm:$0xff]
    %v158 = vld [vmem:[#allocation4 + $0x2b0] sm:$0xff]
    %v159 = vld [vmem:[#allocation4 + $0x2b8] sm:$0xff]
    %v160 = vld [vmem:[#allocation4 + $0x2c0] sm:$0xff]
    %v161 = vld [vmem:[#allocation4 + $0x2c8] sm:$0xff]
    %v162 = vld [vmem:[#allocation4 + $0x2d0] sm:$0xff]
    %v163 = vld [vmem:[#allocation4 + $0x2d8] sm:$0xff]
    %v164 = vld [vmem:[#allocation4 + $0x2e0] sm:$0xff]
    %v165 = vld [vmem:[#allocation4 + $0x2e8] sm:$0xff]
    %v166 = vld [vmem:[#allocation4 + $0x2f0] sm:$0xff]
    %v167 = vld [vmem:[#allocation4 + $0x2f8] sm:$0xff]
    %v168 = vld [vmem:[#allocation4 + $0x300] sm:$0xff]
    %v169 = vld [vmem:[#allocation4 + $0x308] sm:$0xff]
    %v170 = vld [vmem:[#allocation4 + $0x310] sm:$0xff]
    %v171 = vld [vmem:[#allocation4 + $0x318] sm:$0xff]
    %v172 = vld [vmem:[#allocation4 + $0x320] sm:$0xff]
    %v173 = vld [vmem:[#allocation4 + $0x328] sm:$0xff]
    %v174 = vld [vmem:[#allocation4 + $0x330] sm:$0xff]
    %v175 = vld [vmem:[#allocation4 + $0x338] sm:$0xff]
    %v176 = vld [vmem:[#allocation4 + $0x340] sm:$0xff]
    %v177 = vld [vmem:[#allocation4 + $0x348] sm:$0xff]
    %v178 = vld [vmem:[#allocation4 + $0x350] sm:$0xff]
    %v179 = vld [vmem:[#allocation4 + $0x358] sm:$0xff]
    %v180 = vld [vmem:[#allocation4 + $0x360] sm:$0xff]
    %v181 = vld [vmem:[#allocation4 + $0x368] sm:$0xff]
    %v182 = vld [vmem:[#allocation4 + $0x370] sm:$0xff]
    %v183 = vld [vmem:[#allocation4 + $0x378] sm:$0xff]
    %v184 = vld [vmem:[#allocation4 + $0x380] sm:$0xff]
    %v185 = vld [vmem:[#allocation4 + $0x388] sm:$0xff]
    %v186 = vld [vmem:[#allocation4 + $0x390] sm:$0xff]
    %v187 = vld [vmem:[#allocation4 + $0x398] sm:$0xff]
    %v188 = vld [vmem:[#allocation4 + $0x3a0] sm:$0xff]
    %v189 = vld [vmem:[#allocation4 + $0x3a8] sm:$0xff]
    %v190 = vld [vmem:[#allocation4 + $0x3b0] sm:$0xff]
    %v191 = vld [vmem:[#allocation4 + $0x3b8] sm:$0xff]
    %v192 = vld [vmem:[#allocation4 + $0x3c0] sm:$0xff]
    %v193 = vld [vmem:[#allocation4 + $0x3c8] sm:$0xff]
    %v194 = vld [vmem:[#allocation4 + $0x3d0] sm:$0xff]
    %v195 = vld [vmem:[#allocation4 + $0x3d8] sm:$0xff]
    %v196 = vld [vmem:[#allocation4 + $0x3e0] sm:$0xff]
    %v197 = vld [vmem:[#allocation4 + $0x3e8] sm:$0xff]
    %v198 = vld [vmem:[#allocation4 + $0x3f0] sm:$0xff]
    %v199 = vld [vmem:[#allocation4 + $0x3f8] sm:$0xff]
    %200 = vmatprep.subr.mxu0 0.0
    %201 = vmatpush1.msra.mxu0 %v72
    %202 = vmatprep.subr.mxu0 0.0
    %203 = vmatpush1.msra.mxu0 %v73
    %204 = vmatprep.subr.mxu0 0.0
    %205 = vmatpush1.msra.mxu0 %v74
    %206 = vmatprep.subr.mxu0 0.0
    %207 = vmatpush1.msra.mxu0 %v75
    %208 = vmatprep.subr.mxu0 0.0
    %209 = vmatpush1.msra.mxu0 %v76
    %210 = vmatprep.subr.mxu0 0.0
    %211 = vmatpush1.msra.mxu0 %v77
    %212 = vmatprep.subr.mxu0 0.0
    %213 = vmatpush1.msra.mxu0 %v78
    %214 = vmatprep.subr.mxu0 0.0
    %215 = vmatpush1.msra.mxu0 %v79
    %216 = vmatprep.subr.mxu0 0.0
    %217 = vmatpush1.msra.mxu0 %v80
    %218 = vmatprep.subr.mxu0 0.0
    %219 = vmatpush1.msra.mxu0 %v81
    %220 = vmatprep.subr.mxu0 0.0
    %221 = vmatpush1.msra.mxu0 %v82
    %222 = vmatprep.subr.mxu0 0.0
    %223 = vmatpush1.msra.mxu0 %v83
    %224 = vmatprep.subr.mxu0 0.0
    %225 = vmatpush1.msra.mxu0 %v84
    %226 = vmatprep.subr.mxu0 0.0
    %227 = vmatpush1.msra.mxu0 %v85
    %228 = vmatprep.subr.mxu0 0.0
    %229 = vmatpush1.msra.mxu0 %v86
    %230 = vmatprep.subr.mxu0 0.0
    %231 = vmatpush1.msra.mxu0 %v87
    %232 = vmatprep.subr.mxu0 0.0
    %233 = vmatpush1.msra.mxu0 %v88
    %234 = vmatprep.subr.mxu0 0.0
    %235 = vmatpush1.msra.mxu0 %v89
    %236 = vmatprep.subr.mxu0 0.0
    %237 = vmatpush1.msra.mxu0 %v90
    %238 = vmatprep.subr.mxu0 0.0
    %239 = vmatpush1.msra.mxu0 %v91
    %240 = vmatprep.subr.mxu0 0.0
    %241 = vmatpush1.msra.mxu0 %v92
    %242 = vmatprep.subr.mxu0 0.0
    %243 = vmatpush1.msra.mxu0 %v93
    %244 = vmatprep.subr.mxu0 0.0
    %245 = vmatpush1.msra.mxu0 %v94
    %246 = vmatprep.subr.mxu0 0.0
    %247 = vmatpush1.msra.mxu0 %v95
    %248 = vmatprep.subr.mxu0 0.0
    %249 = vmatpush1.msra.mxu0 %v96
    %250 = vmatprep.subr.mxu0 0.0
    %251 = vmatpush1.msra.mxu0 %v97
    %252 = vmatprep.subr.mxu0 0.0
    %253 = vmatpush1.msra.mxu0 %v98
    %254 = vmatprep.subr.mxu0 0.0
    %255 = vmatpush1.msra.mxu0 %v99
    %256 = vmatprep.subr.mxu0 0.0
    %257 = vmatpush1.msra.mxu0 %v100
    %258 = vmatprep.subr.mxu0 0.0
    %259 = vmatpush1.msra.mxu0 %v101
    %260 = vmatprep.subr.mxu0 0.0
    %261 = vmatpush1.msra.mxu0 %v102
    %262 = vmatprep.subr.mxu0 0.0
    %263 = vmatpush1.msra.mxu0 %v103
    %264 = vmatprep.mubr.f32.mxu0 %v65
    %265 = vmatmul.mubr.f32.gmra.mrb[0].mxu0 %v64
    %v266 = vpop.f32.mrb[0].mxu0
    %v267 = vadd.f32 0.0, %v266
    %v268 = vpop.f32.mrb[0].mxu0
    %269 = vdwg.mxu0
    %270 = vmatprep.subr.mxu0 0.0
    %271 = vmatpush1.msra.mxu0 %v104
    %272 = vmatprep.subr.mxu0 0.0
    %273 = vmatpush1.msra.mxu0 %v105
    %274 = vmatprep.subr.mxu0 0.0
    %275 = vmatpush1.msra.mxu0 %v106
    %276 = vmatprep.subr.mxu0 0.0
    %277 = vmatpush1.msra.mxu0 %v107
    %278 = vmatprep.subr.mxu0 0.0
    %279 = vmatpush1.msra.mxu0 %v108
    %280 = vmatprep.subr.mxu0 0.0
    %281 = vmatpush1.msra.mxu0 %v109
    %282 = vmatprep.subr.mxu0 0.0
    %283 = vmatpush1.msra.mxu0 %v110
    %284 = vmatprep.subr.mxu0 0.0
    %285 = vmatpush1.msra.mxu0 %v111
    %286 = vmatprep.subr.mxu0 0.0
    %287 = vmatpush1.msra.mxu0 %v112
    %288 = vmatprep.subr.mxu0 0.0
    %289 = vmatpush1.msra.mxu0 %v113
    %290 = vmatprep.subr.mxu0 0.0
    %291 = vmatpush1.msra.mxu0 %v114
    %292 = vmatprep.subr.mxu0 0.0
    %293 = vmatpush1.msra.mxu0 %v115
    %294 = vmatprep.subr.mxu0 0.0
    %295 = vmatpush1.msra.mxu0 %v116
    %296 = vmatprep.subr.mxu0 0.0
    %297 = vmatpush1.msra.mxu0 %v117
    %298 = vmatprep.subr.mxu0 0.0
    %299 = vmatpush1.msra.mxu0 %v118
    %300 = vmatprep.subr.mxu0 0.0
    %301 = vmatpush1.msra.mxu0 %v119
    %302 = vmatprep.subr.mxu0 0.0
    %303 = vmatpush1.msra.mxu0 %v120
    %304 = vmatprep.subr.mxu0 0.0
    %305 = vmatpush1.msra.mxu0 %v121
    %306 = vmatprep.subr.mxu0 0.0
    %307 = vmatpush1.msra.mxu0 %v122
    %308 = vmatprep.subr.mxu0 0.0
    %309 = vmatpush1.msra.mxu0 %v123
    %310 = vmatprep.subr.mxu0 0.0
    %311 = vmatpush1.msra.mxu0 %v124
    %312 = vmatprep.subr.mxu0 0.0
    %313 = vmatpush1.msra.mxu0 %v125
    %314 = vmatprep.subr.mxu0 0.0
    %315 = vmatpush1.msra.mxu0 %v126
    %316 = vmatprep.subr.mxu0 0.0
    %317 = vmatpush1.msra.mxu0 %v127
    %318 = vmatprep.subr.mxu0 0.0
    %319 = vmatpush1.msra.mxu0 %v128
    %320 = vmatprep.subr.mxu0 0.0
    %321 = vmatpush1.msra.mxu0 %v129
    %322 = vmatprep.subr.mxu0 0.0
    %323 = vmatpush1.msra.mxu0 %v130
    %324 = vmatprep.subr.mxu0 0.0
    %325 = vmatpush1.msra.mxu0 %v131
    %326 = vmatprep.subr.mxu0 0.0
    %327 = vmatpush1.msra.mxu0 %v132
    %328 = vmatprep.subr.mxu0 0.0
    %329 = vmatpush1.msra.mxu0 %v133
    %330 = vmatprep.subr.mxu0 0.0
    %331 = vmatpush1.msra.mxu0 %v134
    %332 = vmatprep.subr.mxu0 0.0
    %333 = vmatpush1.msra.mxu0 %v135
    %334 = vmatprep.mubr.f32.mxu0 %v67
    %335 = vmatmul.mubr.f32.gmra.mrb[0].mxu0 %v66
    %v336 = vpop.f32.mrb[0].mxu0
    %v337 = vadd.f32 %v267, %v336
    %v338 = vpop.f32.mrb[0].mxu0
    %339 = vdwg.mxu0
    %340 = vmatprep.subr.mxu0 0.0
    %341 = vmatpush1.msra.mxu0 %v136
    %342 = vmatprep.subr.mxu0 0.0
    %343 = vmatpush1.msra.mxu0 %v137
    %344 = vmatprep.subr.mxu0 0.0
    %345 = vmatpush1.msra.mxu0 %v138
    %346 = vmatprep.subr.mxu0 0.0
    %347 = vmatpush1.msra.mxu0 %v139
    %348 = vmatprep.subr.mxu0 0.0
    %349 = vmatpush1.msra.mxu0 %v140
    %350 = vmatprep.subr.mxu0 0.0
    %351 = vmatpush1.msra.mxu0 %v141
    %352 = vmatprep.subr.mxu0 0.0
    %353 = vmatpush1.msra.mxu0 %v142
    %354 = vmatprep.subr.mxu0 0.0
    %355 = vmatpush1.msra.mxu0 %v143
    %356 = vmatprep.subr.mxu0 0.0
    %357 = vmatpush1.msra.mxu0 %v144
    %358 = vmatprep.subr.mxu0 0.0
    %359 = vmatpush1.msra.mxu0 %v145
    %360 = vmatprep.subr.mxu0 0.0
    %361 = vmatpush1.msra.mxu0 %v146
    %362 = vmatprep.subr.mxu0 0.0
    %363 = vmatpush1.msra.mxu0 %v147
    %364 = vmatprep.subr.mxu0 0.0
    %365 = vmatpush1.msra.mxu0 %v148
    %366 = vmatprep.subr.mxu0 0.0
    %367 = vmatpush1.msra.mxu0 %v149
    %368 = vmatprep.subr.mxu0 0.0
    %369 = vmatpush1.msra.mxu0 %v150
    %370 = vmatprep.subr.mxu0 0.0
    %371 = vmatpush1.msra.mxu0 %v151
    %372 = vmatprep.subr.mxu0 0.0
    %373 = vmatpush1.msra.mxu0 %v152
    %374 = vmatprep.subr.mxu0 0.0
    %375 = vmatpush1.msra.mxu0 %v153
    %376 = vmatprep.subr.mxu0 0.0
    %377 = vmatpush1.msra.mxu0 %v154
    %378 = vmatprep.subr.mxu0 0.0
    %379 = vmatpush1.msra.mxu0 %v155
    %380 = vmatprep.subr.mxu0 0.0
    %381 = vmatpush1.msra.mxu0 %v156
    %382 = vmatprep.subr.mxu0 0.0
    %383 = vmatpush1.msra.mxu0 %v157
    %384 = vmatprep.subr.mxu0 0.0
    %385 = vmatpush1.msra.mxu0 %v158
    %386 = vmatprep.subr.mxu0 0.0
    %387 = vmatpush1.msra.mxu0 %v159
    %388 = vmatprep.subr.mxu0 0.0
    %389 = vmatpush1.msra.mxu0 %v160
    %390 = vmatprep.subr.mxu0 0.0
    %391 = vmatpush1.msra.mxu0 %v161
    %392 = vmatprep.subr.mxu0 0.0
    %393 = vmatpush1.msra.mxu0 %v162
    %394 = vmatprep.subr.mxu0 0.0
    %395 = vmatpush1.msra.mxu0 %v163
    %396 = vmatprep.subr.mxu0 0.0
    %397 = vmatpush1.msra.mxu0 %v164
    %398 = vmatprep.subr.mxu0 0.0
    %399 = vmatpush1.msra.mxu0 %v165
    %400 = vmatprep.subr.mxu0 0.0
    %401 = vmatpush1.msra.mxu0 %v166
    %402 = vmatprep.subr.mxu0 0.0
    %403 = vmatpush1.msra.mxu0 %v167
    %404 = vmatprep.mubr.f32.mxu0 %v69
    %405 = vmatmul.mubr.f32.gmra.mrb[0].mxu0 %v68
    %v406 = vpop.f32.mrb[0].mxu0
    %v407 = vadd.f32 %v337, %v406
    %v408 = vpop.f32.mrb[0].mxu0
    %409 = vdwg.mxu0
    %410 = vmatprep.subr.mxu0 0.0
    %411 = vmatpush1.msra.mxu0 %v168
    %412 = vmatprep.subr.mxu0 0.0
    %413 = vmatpush1.msra.mxu0 %v169
    %414 = vmatprep.subr.mxu0 0.0
    %415 = vmatpush1.msra.mxu0 %v170
    %416 = vmatprep.subr.mxu0 0.0
    %417 = vmatpush1.msra.mxu0 %v171
    %418 = vmatprep.subr.mxu0 0.0
    %419 = vmatpush1.msra.mxu0 %v172
    %420 = vmatprep.subr.mxu0 0.0
    %421 = vmatpush1.msra.mxu0 %v173
    %422 = vmatprep.subr.mxu0 0.0
    %423 = vmatpush1.msra.mxu0 %v174
    %424 = vmatprep.subr.mxu0 0.0
    %425 = vmatpush1.msra.mxu0 %v175
    %426 = vmatprep.subr.mxu0 0.0
    %427 = vmatpush1.msra.mxu0 %v176
    %428 = vmatprep.subr.mxu0 0.0
    %429 = vmatpush1.msra.mxu0 %v177
    %430 = vmatprep.subr.mxu0 0.0
    %431 = vmatpush1.msra.mxu0 %v178
    %432 = vmatprep.subr.mxu0 0.0
    %433 = vmatpush1.msra.mxu0 %v179
    %434 = vmatprep.subr.mxu0 0.0
    %435 = vmatpush1.msra.mxu0 %v180
    %436 = vmatprep.subr.mxu0 0.0
    %437 = vmatpush1.msra.mxu0 %v181
    %438 = vmatprep.subr.mxu0 0.0
    %439 = vmatpush1.msra.mxu0 %v182
    %440 = vmatprep.subr.mxu0 0.0
    %441 = vmatpush1.msra.mxu0 %v183
    %442 = vmatprep.subr.mxu0 0.0
    %443 = vmatpush1.msra.mxu0 %v184
    %444 = vmatprep.subr.mxu0 0.0
    %445 = vmatpush1.msra.mxu0 %v185
    %446 = vmatprep.subr.mxu0 0.0
    %447 = vmatpush1.msra.mxu0 %v186
    %448 = vmatprep.subr.mxu0 0.0
    %449 = vmatpush1.msra.mxu0 %v187
    %450 = vmatprep.subr.mxu0 0.0
    %451 = vmatpush1.msra.mxu0 %v188
    %452 = vmatprep.subr.mxu0 0.0
    %453 = vmatpush1.msra.mxu0 %v189
    %454 = vmatprep.subr.mxu0 0.0
    %455 = vmatpush1.msra.mxu0 %v190
    %456 = vmatprep.subr.mxu0 0.0
    %457 = vmatpush1.msra.mxu0 %v191
    %458 = vmatprep.subr.mxu0 0.0
    %459 = vmatpush1.msra.mxu0 %v192
    %460 = vmatprep.subr.mxu0 0.0
    %461 = vmatpush1.msra.mxu0 %v193
    %462 = vmatprep.subr.mxu0 0.0
    %463 = vmatpush1.msra.mxu0 %v194
    %464 = vmatprep.subr.mxu0 0.0
    %465 = vmatpush1.msra.mxu0 %v195
    %466 = vmatprep.subr.mxu0 0.0
    %467 = vmatpush1.msra.mxu0 %v196
    %468 = vmatprep.subr.mxu0 0.0
    %469 = vmatpush1.msra.mxu0 %v197
    %470 = vmatprep.subr.mxu0 0.0
    %471 = vmatpush1.msra.mxu0 %v198
    %472 = vmatprep.subr.mxu0 0.0
    %473 = vmatpush1.msra.mxu0 %v199
    %474 = vmatprep.mubr.f32.mxu0 %v71
    %475 = vmatmul.mubr.f32.gmra.mrb[0].mxu0 %v70
    %v476 = vpop.f32.mrb[0].mxu0
    %v477 = vadd.f32 %v407, %v476
    %v478 = vpop.f32.mrb[0].mxu0
    %479 = vdwg.mxu0
    %v480 = vadd.f32 %v63, %v477
    %481 = vst [vmem:[%s4] sm:$0xff] %v480
    // Predicated region
    $region26: #{custom_mlp_forward.1} parent=1 // pred_check
      _
    $region27: #{custom_mlp_forward.1} parent=1 // pred_check_branch
      %483 = sbr.rel (0) target = $region29
    $region28: #{custom_mlp_forward.1} parent=1 // pred_region
      _
    $region29: #{custom_mlp_forward.1} parent=1 // pred_fallthru
      _
    // Predicated region
    $region30: #{custom_mlp_forward.1} parent=1 // pred_check
      _
    $region31: #{custom_mlp_forward.1} parent=1 // pred_check_branch
      %485 = sbr.rel (0) target = $region33
    $region32: #{custom_mlp_forward.1} parent=1 // pred_region
      _
    $region33: #{custom_mlp_forward.1} parent=1 // pred_fallthru
      _
    %486 = vsyncpa [#allocation5], 1
    %487 = vsyncpa [#allocation7], 1

</llo_original>
